<compile_context>
chip_gen: v7x
topology: tpu7x:2x2x1
jax: 0.10.0
libtpu: 0.0.40
codegen_flags: <defaults>
</compile_context>

<pallas_src>
import functools

import jax
import jax.numpy as jnp
from jax import lax
from jax.experimental import pallas as pl
from jax.experimental.pallas import tpu as pltpu

BN_EPS = 1e-5


# ---------------------------------------------------------------------------
# Fused C3 kernel: [cv1|cv2] (1x1) -> Bottleneck(1x1, 3x3, +res) -> cv3 (1x1)
# ---------------------------------------------------------------------------
def _c3_kernel(x_ref, masks_ref,
               w_a_ref, b_a_ref,        # fused cv1|cv2 (2c_, c1)
               w_m1_ref, b_m1_ref,      # Bottleneck.cv1, zero-padded K=2c_
               w_m2_ref, b_m2_ref,      # Bottleneck.cv2 3x3 im2col, K padded
               w_cv3_ref, b_cv3_ref,    # cv3 (c2, 2c_)
               o_ref, patches_ref, *, W):
    x = x_ref[...]                                   # (c1, N*HW) f32
    nhw = x.shape[1]

    def silu(v):                                     # sigmoid via tanh -> EUP
        return v * (0.5 * jnp.tanh(0.5 * v) + 0.5)

    def mxu(w_ref, a):                               # bf16 operands, f32 acc
        return jnp.dot(w_ref[...], a.astype(jnp.bfloat16),
                       preferred_element_type=jnp.float32)

    # cv1 & cv2 (1x1 conv + folded BN + SiLU) as ONE dot.
    # Rows 0:c_ = cv1 output (y1), rows c_:2c_ = cv2 output (y2).
    y12 = silu(mxu(w_a_ref, x) + b_a_ref[...])       # (2c_, N*HW)

    # Bottleneck.cv1 (1x1): weight zero-padded over the y2 rows -> contracts
    # the full y12 stack, no sublane slicing.
    z1 = silu(mxu(w_m1_ref, y12) + b_m1_ref[...])    # (c_, N*HW)
    c_ = z1.shape[0]

    # Bottleneck.cv2 (3x3, 'same') as ONE im2col matmul.  Each tap is a lane
    # rotation of the flat N*HW axis (XLU, cheap); the precomputed border
    # masks zero both the image borders and the image-to-image roll wrap, so
    # zero padding never materializes.  Taps land in an 8-aligned VMEM scratch.
    t = 0
    for dy in (-1, 0, 1):
        for dx in (-1, 0, 1):
            d = dy * W + dx                          # flat-index tap offset
            shifted = z1 if d == 0 else pltpu.roll(z1, shift=(-d) % nhw, axis=1)
            patches_ref[pl.ds(t * c_, c_), :] = shifted * masks_ref[t]
            t += 1
    k_used = 9 * c_
    k_pad = patches_ref.shape[0]
    if k_pad > k_used:                               # static: zero padded rows
        patches_ref[pl.ds(k_used, k_pad - k_used), :] = jnp.zeros(
            (k_pad - k_used, nhw), jnp.float32)
    z2 = silu(mxu(w_m2_ref, patches_ref[...]) + b_m2_ref[...])   # (c_, N*HW)

    # cv3 over cat([y1 + z2, y2], channel) == y12 + [z2; 0]: a single dot.
    cv3_in = y12 + jnp.concatenate([z2, jnp.zeros_like(z2)], axis=0)
    out = silu(mxu(w_cv3_ref, cv3_in) + b_cv3_ref[...])          # (c2, N*HW)
    o_ref[...] = out.astype(o_ref.dtype)


def c3_forward(x_nchw, kp):
    N, C1, H, W = x_nchw.shape
    HW, NHW = H * W, N * H * W
    C2 = kp["w_cv3"].shape[0]
    k_pad = kp["w_m2"].shape[1]

    # NCHW -> (C, N*H*W): channels on sublanes, flat batch*space on lanes.
    x2d = jnp.transpose(x_nchw, (1, 0, 2, 3)).reshape(C1, NHW)

    # Constant per-tap border masks (repeat per image via lane % HW); depends
    # only on static shapes, so it constant-folds under jit.
    lane = jnp.arange(NHW, dtype=jnp.int32)
    p = lane % HW
    row, col = p // W, p % W
    masks = jnp.stack(
        [((row + dy >= 0) & (row + dy < H) &
          (col + dx >= 0) & (col + dx < W)).astype(jnp.float32)
         for dy in (-1, 0, 1) for dx in (-1, 0, 1)],
        axis=0)[:, None, :]                          # (9, 1, N*HW)

    weights = (kp["w_a"], kp["b_a"], kp["w_m1"], kp["b_m1"],
               kp["w_m2"], kp["b_m2"], kp["w_cv3"], kp["b_cv3"])

    def full_block(a):                               # whole (tiny) weight block
        nd = a.ndim
        return pl.BlockSpec(a.shape, lambda i, _nd=nd: (0,) * _nd)

    out2d = pl.pallas_call(
        functools.partial(_c3_kernel, W=W),
        out_shape=jax.ShapeDtypeStruct((C2, NHW), jnp.float32),
        grid=(1,),
        in_specs=[pl.BlockSpec((C1, NHW), lambda i: (0, 0)),
                  pl.BlockSpec((9, 1, NHW), lambda i: (0, 0, 0))]
                 + [full_block(w) for w in weights],
        out_specs=pl.BlockSpec((C2, NHW), lambda i: (0, 0)),
        scratch_shapes=[pltpu.VMEM((k_pad, NHW), jnp.float32)],
    )(x2d, masks, *weights)

    return out2d.reshape(C2, N, H, W).transpose(1, 0, 2, 3)


# ---------------------------------------------------------------------------
# Deterministic parameters (BN folded) + kernel-layout packing
# ---------------------------------------------------------------------------
def make_conv_params(key, cin, cout, k):
    k1, k2, k3, k4, k5 = jax.random.split(key, 5)
    w = 0.1 * jax.random.normal(k1, (cout, cin, k, k), jnp.float32)
    gamma = 1.0 + 0.1 * jax.random.normal(k2, (cout,), jnp.float32)
    beta = 0.1 * jax.random.normal(k3, (cout,), jnp.float32)
    mean = 0.1 * jax.random.normal(k4, (cout,), jnp.float32)
    var = jax.random.uniform(k5, (cout,), jnp.float32, 0.5, 1.5)
    scale = gamma / jnp.sqrt(var + BN_EPS)
    return w * scale[:, None, None, None], beta - mean * scale   # folded BN


def build_kernel_params(p):
    f32, bf16 = jnp.float32, jnp.bfloat16

    def as_mat(w):
        co, ci, kh, kw = w.shape
        # column order (ky, kx, ci) matches the kernel's tap-stacking order
        return jnp.transpose(w, (0, 2, 3, 1)).reshape(co, kh * kw * ci)

    w1, b1 = as_mat(p["cv1"][0]), p["cv1"][1]
    w2, b2 = as_mat(p["cv2"][0]), p["cv2"][1]
    wm1, bm1 = as_mat(p["m_cv1"][0]), p["m_cv1"][1]
    wm2, bm2 = as_mat(p["m_cv2"][0]), p["m_cv2"][1]
    w3, b3 = as_mat(p["cv3"][0]), p["cv3"][1]

    # cv1|cv2 stacked -> one MXU dot; rows 0:c_ = cv1, c_:2c_ = cv2.
    w_a = jnp.concatenate([w1, w2], axis=0)
    b_a = jnp.concatenate([b1, b2], axis=0)[:, None]
    # Bottleneck.cv1 zero-padded over the y2 rows: contracts y12 directly.
    w_m1 = jnp.concatenate([wm1, jnp.zeros_like(wm1)], axis=1)
    # Bottleneck.cv2 im2col weight zero-padded to an 8-sublane-aligned K.
    k_used = wm2.shape[1]
    k_pad = ((k_used + 7) // 8) * 8
    w_m2 = jnp.pad(wm2, ((0, 0), (0, k_pad - k_used)))

    return dict(w_a=w_a.astype(bf16),  b_a=b_a.astype(f32),
                w_m1=w_m1.astype(bf16), b_m1=bm1[:, None].astype(f32),
                w_m2=w_m2.astype(bf16), b_m2=bm2[:, None].astype(f32),
                w_cv3=w3.astype(bf16),  b_cv3=b3[:, None].astype(f32))


# ---------------------------------------------------------------------------
# Pure-JAX reference (matches PyTorch C3 forward, eval-mode BN folded)
# ---------------------------------------------------------------------------
def _conv_bn_silu_ref(x, w, b, k):
    y = lax.conv_general_dilated(
        x, w, window_strides=(1, 1), padding=[(k // 2, k // 2)] * 2,
        dimension_numbers=("NCHW", "OIHW", "NCHW"),
        precision=lax.Precision.HIGHEST)
    y = y + b[None, :, None, None]
    return y * jax.nn.sigmoid(y)


def c3_reference(x, p):
    y1 = _conv_bn_silu_ref(x, *p["cv1"], 1)
    y2 = _conv_bn_silu_ref(x, *p["cv2"], 1)
    z1 = _conv_bn_silu_ref(y1, *p["m_cv1"], 1)
    z2 = _conv_bn_silu_ref(z1, *p["m_cv2"], 3)
    zb = y1 + z2                                     # Bottleneck shortcut
    return _conv_bn_silu_ref(jnp.concatenate([zb, y2], axis=1), *p["cv3"], 1)


# ---------------------------------------------------------------------------
if __name__ == "__main__":
    key = jax.random.PRNGKey(0)
    kx, k1, k2, k3, k4, k5 = jax.random.split(key, 6)

    N, C1, H, W = 2, 4, 16, 16        # PyTorch x: (2, 4, 16, 16) NCHW
    C2, e = 8, 0.5
    C_ = int(C2 * e)                  # hidden width = 4

    raw = {
        "cv1":   make_conv_params(k1, C1, C_, 1),      # Conv(c1, c_, 1)  SiLU
        "cv2":   make_conv_params(k2, C1, C_, 1),      # Conv(c1, c_, 1)  SiLU
        "m_cv1": make_conv_params(k3, C_, C_, 1),      # Bottleneck.cv1   SiLU
        "m_cv2": make_conv_params(k4, C_, C_, 3),      # Bottleneck.cv2   SiLU
        "cv3":   make_conv_params(k5, 2 * C_, C2, 1),  # Conv(2c_, c2, 1) SiLU
    }
    kp = build_kernel_params(raw)

    x = jax.random.normal(kx, (N, C1, H, W), jnp.float32)

    fwd = jax.jit(c3_forward)
    out = jax.block_until_ready(fwd(x, kp))

    assert out.shape == (N, C2, H, W)
    assert bool(jnp.all(jnp.isfinite(out)))

    ref = c3_reference(x, raw)
    max_err = float(jnp.max(jnp.abs(out - ref)))
    # bf16 MXU operands (f32 accumulation) -> slightly looser bound than f32.
    assert max_err < 3e-2, f"mismatch vs reference: max abs err {max_err}"

    print("KERNEL_OK")
</pallas_src>

<mosaic_0001>
module attributes {stable_mosaic.version = 11 : i64} {
  func.func @_c3_kernel(%arg0: i32, %arg1: memref<4x512xf32, #tpu.memory_space<vmem>>, %arg2: memref<9x1x512xf32, #tpu.memory_space<vmem>>, %arg3: memref<8x4xbf16, #tpu.memory_space<vmem>>, %arg4: memref<8x1xf32, #tpu.memory_space<vmem>>, %arg5: memref<4x8xbf16, #tpu.memory_space<vmem>>, %arg6: memref<4x1xf32, #tpu.memory_space<vmem>>, %arg7: memref<4x40xbf16, #tpu.memory_space<vmem>>, %arg8: memref<4x1xf32, #tpu.memory_space<vmem>>, %arg9: memref<8x8xbf16, #tpu.memory_space<vmem>>, %arg10: memref<8x1xf32, #tpu.memory_space<vmem>>, %arg11: memref<8x512xf32, #tpu.memory_space<vmem>>, %arg12: memref<40x512xf32, #tpu.memory_space<vmem>>) attributes {dimension_semantics = [#tpu.dimension_semantics<arbitrary>], iteration_bounds = array<i64: 1>, scalar_prefetch = 0 : i64, scratch_operands = 1 : i64, tpu.core_type = #tpu.core_type<tc>, window_params = [{pipeline_mode = #tpu.pipeline_mode<synchronous>, transform_indices = @transform_0, window_bounds = array<i64: 4, 512>}, {pipeline_mode = #tpu.pipeline_mode<synchronous>, transform_indices = @transform_1, window_bounds = array<i64: 9, 1, 512>}, {pipeline_mode = #tpu.pipeline_mode<synchronous>, transform_indices = @transform_2, window_bounds = array<i64: 8, 4>}, {pipeline_mode = #tpu.pipeline_mode<synchronous>, transform_indices = @transform_3, window_bounds = array<i64: 8, 1>}, {pipeline_mode = #tpu.pipeline_mode<synchronous>, transform_indices = @transform_4, window_bounds = array<i64: 4, 8>}, {pipeline_mode = #tpu.pipeline_mode<synchronous>, transform_indices = @transform_5, window_bounds = array<i64: 4, 1>}, {pipeline_mode = #tpu.pipeline_mode<synchronous>, transform_indices = @transform_6, window_bounds = array<i64: 4, 40>}, {pipeline_mode = #tpu.pipeline_mode<synchronous>, transform_indices = @transform_7, window_bounds = array<i64: 4, 1>}, {pipeline_mode = #tpu.pipeline_mode<synchronous>, transform_indices = @transform_8, window_bounds = array<i64: 8, 8>}, {pipeline_mode = #tpu.pipeline_mode<synchronous>, transform_indices = @transform_9, window_bounds = array<i64: 8, 1>}, {pipeline_mode = #tpu.pipeline_mode<synchronous>, transform_indices = @transform_10, window_bounds = array<i64: 8, 512>}]} {
    %c0 = arith.constant 0 : index
    %c0_0 = arith.constant 0 : index
    %0 = vector.load %arg1[%c0, %c0_0] : memref<4x512xf32, #tpu.memory_space<vmem>>, vector<4x512xf32>
    %c0_1 = arith.constant 0 : index
    %c0_2 = arith.constant 0 : index
    %1 = vector.load %arg3[%c0_1, %c0_2] : memref<8x4xbf16, #tpu.memory_space<vmem>>, vector<8x4xbf16>
    %2 = arith.truncf %0 : vector<4x512xf32> to vector<4x512xbf16>
    %cst = arith.constant dense<0.000000e+00> : vector<8x512xf32>
    %3 = tpu.matmul %1, %2, %cst {dimension_numbers = #tpu.dot_dimension_numbers<[1], [0], [0], [1], [0, 0, 1, 1], [], []>} : vector<8x4xbf16>, vector<4x512xbf16>, vector<8x512xf32> -> vector<8x512xf32>
    %c0_3 = arith.constant 0 : index
    %c0_4 = arith.constant 0 : index
    %4 = vector.load %arg4[%c0_3, %c0_4] : memref<8x1xf32, #tpu.memory_space<vmem>>, vector<8x1xf32>
    %5 = vector.broadcast %4 : vector<8x1xf32> to vector<8x512xf32>
    %6 = arith.addf %3, %5 : vector<8x512xf32>
    %cst_5 = arith.constant 5.000000e-01 : f32
    %7 = vector.broadcast %cst_5 : f32 to vector<8x512xf32>
    %8 = arith.mulf %7, %6 : vector<8x512xf32>
    %9 = math.tanh %8 : vector<8x512xf32>
    %cst_6 = arith.constant 5.000000e-01 : f32
    %10 = vector.broadcast %cst_6 : f32 to vector<8x512xf32>
    %11 = arith.mulf %10, %9 : vector<8x512xf32>
    %cst_7 = arith.constant 5.000000e-01 : f32
    %12 = vector.broadcast %cst_7 : f32 to vector<8x512xf32>
    %13 = arith.addf %11, %12 : vector<8x512xf32>
    %14 = arith.mulf %6, %13 : vector<8x512xf32>
    %c0_8 = arith.constant 0 : index
    %c0_9 = arith.constant 0 : index
    %15 = vector.load %arg5[%c0_8, %c0_9] : memref<4x8xbf16, #tpu.memory_space<vmem>>, vector<4x8xbf16>
    %16 = arith.truncf %14 : vector<8x512xf32> to vector<8x512xbf16>
    %cst_10 = arith.constant dense<0.000000e+00> : vector<4x512xf32>
    %17 = tpu.matmul %15, %16, %cst_10 {dimension_numbers = #tpu.dot_dimension_numbers<[1], [0], [0], [1], [0, 0, 1, 1], [], []>} : vector<4x8xbf16>, vector<8x512xbf16>, vector<4x512xf32> -> vector<4x512xf32>
    %c0_11 = arith.constant 0 : index
    %c0_12 = arith.constant 0 : index
    %18 = vector.load %arg6[%c0_11, %c0_12] : memref<4x1xf32, #tpu.memory_space<vmem>>, vector<4x1xf32>
    %19 = vector.broadcast %18 : vector<4x1xf32> to vector<4x512xf32>
    %20 = arith.addf %17, %19 : vector<4x512xf32>
    %cst_13 = arith.constant 5.000000e-01 : f32
    %21 = vector.broadcast %cst_13 : f32 to vector<4x512xf32>
    %22 = arith.mulf %21, %20 : vector<4x512xf32>
    %23 = math.tanh %22 : vector<4x512xf32>
    %cst_14 = arith.constant 5.000000e-01 : f32
    %24 = vector.broadcast %cst_14 : f32 to vector<4x512xf32>
    %25 = arith.mulf %24, %23 : vector<4x512xf32>
    %cst_15 = arith.constant 5.000000e-01 : f32
    %26 = vector.broadcast %cst_15 : f32 to vector<4x512xf32>
    %27 = arith.addf %25, %26 : vector<4x512xf32>
    %28 = arith.mulf %20, %27 : vector<4x512xf32>
    %c17_i32 = arith.constant 17 : i32
    %29 = tpu.dynamic_rotate %28 by %c17_i32 dim 1 : vector<4x512xf32>, i32 -> vector<4x512xf32>
    %c0_16 = arith.constant 0 : index
    %c0_17 = arith.constant 0 : index
    %c0_18 = arith.constant 0 : index
    %30 = vector.load %arg2[%c0_16, %c0_17, %c0_18] : memref<9x1x512xf32, #tpu.memory_space<vmem>>, vector<1x1x512xf32>
    %31 = vector.shape_cast %30 : vector<1x1x512xf32> to vector<1x512xf32>
    %32 = vector.broadcast %31 : vector<1x512xf32> to vector<4x512xf32>
    %33 = arith.mulf %29, %32 : vector<4x512xf32>
    %c0_19 = arith.constant 0 : index
    %c0_20 = arith.constant 0 : index
    %34 = vector.load %arg12[%c0_19, %c0_20] : memref<40x512xf32, #tpu.memory_space<vmem>>, vector<4x512xf32>
    tpu.vector_store %arg12[%c0_19, %c0_20], %33 {strides = array<i32>} : memref<40x512xf32, #tpu.memory_space<vmem>>, vector<4x512xf32>,
    %c16_i32 = arith.constant 16 : i32
    %35 = tpu.dynamic_rotate %28 by %c16_i32 dim 1 : vector<4x512xf32>, i32 -> vector<4x512xf32>
    %c1 = arith.constant 1 : index
    %c0_21 = arith.constant 0 : index
    %c0_22 = arith.constant 0 : index
    %36 = vector.load %arg2[%c1, %c0_21, %c0_22] : memref<9x1x512xf32, #tpu.memory_space<vmem>>, vector<1x1x512xf32>
    %37 = vector.shape_cast %36 : vector<1x1x512xf32> to vector<1x512xf32>
    %38 = vector.broadcast %37 : vector<1x512xf32> to vector<4x512xf32>
    %39 = arith.mulf %35, %38 : vector<4x512xf32>
    %c4 = arith.constant 4 : index
    %c0_23 = arith.constant 0 : index
    %40 = vector.load %arg12[%c4, %c0_23] : memref<40x512xf32, #tpu.memory_space<vmem>>, vector<4x512xf32>
    tpu.vector_store %arg12[%c4, %c0_23], %39 {strides = array<i32>} : memref<40x512xf32, #tpu.memory_space<vmem>>, vector<4x512xf32>,
    %c15_i32 = arith.constant 15 : i32
    %41 = tpu.dynamic_rotate %28 by %c15_i32 dim 1 : vector<4x512xf32>, i32 -> vector<4x512xf32>
    %c2 = arith.constant 2 : index
    %c0_24 = arith.constant 0 : index
    %c0_25 = arith.constant 0 : index
    %42 = vector.load %arg2[%c2, %c0_24, %c0_25] : memref<9x1x512xf32, #tpu.memory_space<vmem>>, vector<1x1x512xf32>
    %43 = vector.shape_cast %42 : vector<1x1x512xf32> to vector<1x512xf32>
    %44 = vector.broadcast %43 : vector<1x512xf32> to vector<4x512xf32>
    %45 = arith.mulf %41, %44 : vector<4x512xf32>
    %c8 = arith.constant 8 : index
    %c0_26 = arith.constant 0 : index
    %46 = vector.load %arg12[%c8, %c0_26] : memref<40x512xf32, #tpu.memory_space<vmem>>, vector<4x512xf32>
    tpu.vector_store %arg12[%c8, %c0_26], %45 {strides = array<i32>} : memref<40x512xf32, #tpu.memory_space<vmem>>, vector<4x512xf32>,
    %c1_i32 = arith.constant 1 : i32
    %47 = tpu.dynamic_rotate %28 by %c1_i32 dim 1 : vector<4x512xf32>, i32 -> vector<4x512xf32>
    %c3 = arith.constant 3 : index
    %c0_27 = arith.constant 0 : index
    %c0_28 = arith.constant 0 : index
    %48 = vector.load %arg2[%c3, %c0_27, %c0_28] : memref<9x1x512xf32, #tpu.memory_space<vmem>>, vector<1x1x512xf32>
    %49 = vector.shape_cast %48 : vector<1x1x512xf32> to vector<1x512xf32>
    %50 = vector.broadcast %49 : vector<1x512xf32> to vector<4x512xf32>
    %51 = arith.mulf %47, %50 : vector<4x512xf32>
    %c12 = arith.constant 12 : index
    %c0_29 = arith.constant 0 : index
    %52 = vector.load %arg12[%c12, %c0_29] : memref<40x512xf32, #tpu.memory_space<vmem>>, vector<4x512xf32>
    tpu.vector_store %arg12[%c12, %c0_29], %51 {strides = array<i32>} : memref<40x512xf32, #tpu.memory_space<vmem>>, vector<4x512xf32>,
    %c4_30 = arith.constant 4 : index
    %c0_31 = arith.constant 0 : index
    %c0_32 = arith.constant 0 : index
    %53 = vector.load %arg2[%c4_30, %c0_31, %c0_32] : memref<9x1x512xf32, #tpu.memory_space<vmem>>, vector<1x1x512xf32>
    %54 = vector.shape_cast %53 : vector<1x1x512xf32> to vector<1x512xf32>
    %55 = vector.broadcast %54 : vector<1x512xf32> to vector<4x512xf32>
    %56 = arith.mulf %28, %55 : vector<4x512xf32>
    %c16 = arith.constant 16 : index
    %c0_33 = arith.constant 0 : index
    %57 = vector.load %arg12[%c16, %c0_33] : memref<40x512xf32, #tpu.memory_space<vmem>>, vector<4x512xf32>
    tpu.vector_store %arg12[%c16, %c0_33], %56 {strides = array<i32>} : memref<40x512xf32, #tpu.memory_space<vmem>>, vector<4x512xf32>,
    %c511_i32 = arith.constant 511 : i32
    %58 = tpu.dynamic_rotate %28 by %c511_i32 dim 1 : vector<4x512xf32>, i32 -> vector<4x512xf32>
    %c5 = arith.constant 5 : index
    %c0_34 = arith.constant 0 : index
    %c0_35 = arith.constant 0 : index
    %59 = vector.load %arg2[%c5, %c0_34, %c0_35] : memref<9x1x512xf32, #tpu.memory_space<vmem>>, vector<1x1x512xf32>
    %60 = vector.shape_cast %59 : vector<1x1x512xf32> to vector<1x512xf32>
    %61 = vector.broadcast %60 : vector<1x512xf32> to vector<4x512xf32>
    %62 = arith.mulf %58, %61 : vector<4x512xf32>
    %c20 = arith.constant 20 : index
    %c0_36 = arith.constant 0 : index
    %63 = vector.load %arg12[%c20, %c0_36] : memref<40x512xf32, #tpu.memory_space<vmem>>, vector<4x512xf32>
    tpu.vector_store %arg12[%c20, %c0_36], %62 {strides = array<i32>} : memref<40x512xf32, #tpu.memory_space<vmem>>, vector<4x512xf32>,
    %c497_i32 = arith.constant 497 : i32
    %64 = tpu.dynamic_rotate %28 by %c497_i32 dim 1 : vector<4x512xf32>, i32 -> vector<4x512xf32>
    %c6 = arith.constant 6 : index
    %c0_37 = arith.constant 0 : index
    %c0_38 = arith.constant 0 : index
    %65 = vector.load %arg2[%c6, %c0_37, %c0_38] : memref<9x1x512xf32, #tpu.memory_space<vmem>>, vector<1x1x512xf32>
    %66 = vector.shape_cast %65 : vector<1x1x512xf32> to vector<1x512xf32>
    %67 = vector.broadcast %66 : vector<1x512xf32> to vector<4x512xf32>
    %68 = arith.mulf %64, %67 : vector<4x512xf32>
    %c24 = arith.constant 24 : index
    %c0_39 = arith.constant 0 : index
    %69 = vector.load %arg12[%c24, %c0_39] : memref<40x512xf32, #tpu.memory_space<vmem>>, vector<4x512xf32>
    tpu.vector_store %arg12[%c24, %c0_39], %68 {strides = array<i32>} : memref<40x512xf32, #tpu.memory_space<vmem>>, vector<4x512xf32>,
    %c496_i32 = arith.constant 496 : i32
    %70 = tpu.dynamic_rotate %28 by %c496_i32 dim 1 : vector<4x512xf32>, i32 -> vector<4x512xf32>
    %c7 = arith.constant 7 : index
    %c0_40 = arith.constant 0 : index
    %c0_41 = arith.constant 0 : index
    %71 = vector.load %arg2[%c7, %c0_40, %c0_41] : memref<9x1x512xf32, #tpu.memory_space<vmem>>, vector<1x1x512xf32>
    %72 = vector.shape_cast %71 : vector<1x1x512xf32> to vector<1x512xf32>
    %73 = vector.broadcast %72 : vector<1x512xf32> to vector<4x512xf32>
    %74 = arith.mulf %70, %73 : vector<4x512xf32>
    %c28 = arith.constant 28 : index
    %c0_42 = arith.constant 0 : index
    %75 = vector.load %arg12[%c28, %c0_42] : memref<40x512xf32, #tpu.memory_space<vmem>>, vector<4x512xf32>
    tpu.vector_store %arg12[%c28, %c0_42], %74 {strides = array<i32>} : memref<40x512xf32, #tpu.memory_space<vmem>>, vector<4x512xf32>,
    %c495_i32 = arith.constant 495 : i32
    %76 = tpu.dynamic_rotate %28 by %c495_i32 dim 1 : vector<4x512xf32>, i32 -> vector<4x512xf32>
    %c8_43 = arith.constant 8 : index
    %c0_44 = arith.constant 0 : index
    %c0_45 = arith.constant 0 : index
    %77 = vector.load %arg2[%c8_43, %c0_44, %c0_45] : memref<9x1x512xf32, #tpu.memory_space<vmem>>, vector<1x1x512xf32>
    %78 = vector.shape_cast %77 : vector<1x1x512xf32> to vector<1x512xf32>
    %79 = vector.broadcast %78 : vector<1x512xf32> to vector<4x512xf32>
    %80 = arith.mulf %76, %79 : vector<4x512xf32>
    %c32 = arith.constant 32 : index
    %c0_46 = arith.constant 0 : index
    %81 = vector.load %arg12[%c32, %c0_46] : memref<40x512xf32, #tpu.memory_space<vmem>>, vector<4x512xf32>
    tpu.vector_store %arg12[%c32, %c0_46], %80 {strides = array<i32>} : memref<40x512xf32, #tpu.memory_space<vmem>>, vector<4x512xf32>,
    %cst_47 = arith.constant 0.000000e+00 : f32
    %82 = vector.broadcast %cst_47 : f32 to vector<4x512xf32>
    %c36 = arith.constant 36 : index
    %c0_48 = arith.constant 0 : index
    %83 = vector.load %arg12[%c36, %c0_48] : memref<40x512xf32, #tpu.memory_space<vmem>>, vector<4x512xf32>
    tpu.vector_store %arg12[%c36, %c0_48], %82 {strides = array<i32>} : memref<40x512xf32, #tpu.memory_space<vmem>>, vector<4x512xf32>,
    %c0_49 = arith.constant 0 : index
    %c0_50 = arith.constant 0 : index
    %84 = vector.load %arg12[%c0_49, %c0_50] : memref<40x512xf32, #tpu.memory_space<vmem>>, vector<40x512xf32>
    %c0_51 = arith.constant 0 : index
    %c0_52 = arith.constant 0 : index
    %85 = vector.load %arg7[%c0_51, %c0_52] : memref<4x40xbf16, #tpu.memory_space<vmem>>, vector<4x40xbf16>
    %86 = arith.truncf %84 : vector<40x512xf32> to vector<40x512xbf16>
    %cst_53 = arith.constant dense<0.000000e+00> : vector<4x512xf32>
    %87 = tpu.matmul %85, %86, %cst_53 {dimension_numbers = #tpu.dot_dimension_numbers<[1], [0], [0], [1], [0, 0, 1, 1], [], []>} : vector<4x40xbf16>, vector<40x512xbf16>, vector<4x512xf32> -> vector<4x512xf32>
    %c0_54 = arith.constant 0 : index
    %c0_55 = arith.constant 0 : index
    %88 = vector.load %arg8[%c0_54, %c0_55] : memref<4x1xf32, #tpu.memory_space<vmem>>, vector<4x1xf32>
    %89 = vector.broadcast %88 : vector<4x1xf32> to vector<4x512xf32>
    %90 = arith.addf %87, %89 : vector<4x512xf32>
    %cst_56 = arith.constant 5.000000e-01 : f32
    %91 = vector.broadcast %cst_56 : f32 to vector<4x512xf32>
    %92 = arith.mulf %91, %90 : vector<4x512xf32>
    %93 = math.tanh %92 : vector<4x512xf32>
    %cst_57 = arith.constant 5.000000e-01 : f32
    %94 = vector.broadcast %cst_57 : f32 to vector<4x512xf32>
    %95 = arith.mulf %94, %93 : vector<4x512xf32>
    %cst_58 = arith.constant 5.000000e-01 : f32
    %96 = vector.broadcast %cst_58 : f32 to vector<4x512xf32>
    %97 = arith.addf %95, %96 : vector<4x512xf32>
    %98 = arith.mulf %90, %97 : vector<4x512xf32>
    %cst_59 = arith.constant 0.000000e+00 : f32
    %99 = vector.broadcast %cst_59 : f32 to vector<4x512xf32>
    %100 = tpu.concatenate %98, %99 in 0 : vector<4x512xf32>, vector<4x512xf32> -> vector<8x512xf32>
    %101 = arith.addf %14, %100 : vector<8x512xf32>
    %c0_60 = arith.constant 0 : index
    %c0_61 = arith.constant 0 : index
    %102 = vector.load %arg9[%c0_60, %c0_61] : memref<8x8xbf16, #tpu.memory_space<vmem>>, vector<8x8xbf16>
    %103 = arith.truncf %101 : vector<8x512xf32> to vector<8x512xbf16>
    %cst_62 = arith.constant dense<0.000000e+00> : vector<8x512xf32>
    %104 = tpu.matmul %102, %103, %cst_62 {dimension_numbers = #tpu.dot_dimension_numbers<[1], [0], [0], [1], [0, 0, 1, 1], [], []>} : vector<8x8xbf16>, vector<8x512xbf16>, vector<8x512xf32> -> vector<8x512xf32>
    %c0_63 = arith.constant 0 : index
    %c0_64 = arith.constant 0 : index
    %105 = vector.load %arg10[%c0_63, %c0_64] : memref<8x1xf32, #tpu.memory_space<vmem>>, vector<8x1xf32>
    %106 = vector.broadcast %105 : vector<8x1xf32> to vector<8x512xf32>
    %107 = arith.addf %104, %106 : vector<8x512xf32>
    %cst_65 = arith.constant 5.000000e-01 : f32
    %108 = vector.broadcast %cst_65 : f32 to vector<8x512xf32>
    %109 = arith.mulf %108, %107 : vector<8x512xf32>
    %110 = math.tanh %109 : vector<8x512xf32>
    %cst_66 = arith.constant 5.000000e-01 : f32
    %111 = vector.broadcast %cst_66 : f32 to vector<8x512xf32>
    %112 = arith.mulf %111, %110 : vector<8x512xf32>
    %cst_67 = arith.constant 5.000000e-01 : f32
    %113 = vector.broadcast %cst_67 : f32 to vector<8x512xf32>
    %114 = arith.addf %112, %113 : vector<8x512xf32>
    %115 = arith.mulf %107, %114 : vector<8x512xf32>
    %c0_68 = arith.constant 0 : index
    %c0_69 = arith.constant 0 : index
    %116 = vector.load %arg11[%c0_68, %c0_69] : memref<8x512xf32, #tpu.memory_space<vmem>>, vector<8x512xf32>
    tpu.vector_store %arg11[%c0_68, %c0_69], %115 {strides = array<i32>} : memref<8x512xf32, #tpu.memory_space<vmem>>, vector<8x512xf32>,
    return
  }
  func.func @transform_0(%arg0: i32) -> (i32, i32) {
    %c0_i32 = arith.constant 0 : i32
    %c0_i32_0 = arith.constant 0 : i32
    %c0_i32_1 = arith.constant 0 : i32
    return %c0_i32, %c0_i32_0 : i32, i32
  }
  func.func @transform_1(%arg0: i32) -> (i32, i32, i32) {
    %c0_i32 = arith.constant 0 : i32
    %c0_i32_0 = arith.constant 0 : i32
    %c0_i32_1 = arith.constant 0 : i32
    %c0_i32_2 = arith.constant 0 : i32
    return %c0_i32, %c0_i32_0, %c0_i32_1 : i32, i32, i32
  }
  func.func @transform_2(%arg0: i32) -> (i32, i32) {
    %c0_i32 = arith.constant 0 : i32
    %c0_i32_0 = arith.constant 0 : i32
    %c0_i32_1 = arith.constant 0 : i32
    return %c0_i32, %c0_i32_0 : i32, i32
  }
  func.func @transform_3(%arg0: i32) -> (i32, i32) {
    %c0_i32 = arith.constant 0 : i32
    %c0_i32_0 = arith.constant 0 : i32
    %c0_i32_1 = arith.constant 0 : i32
    return %c0_i32, %c0_i32_0 : i32, i32
  }
  func.func @transform_4(%arg0: i32) -> (i32, i32) {
    %c0_i32 = arith.constant 0 : i32
    %c0_i32_0 = arith.constant 0 : i32
    %c0_i32_1 = arith.constant 0 : i32
    return %c0_i32, %c0_i32_0 : i32, i32
  }
  func.func @transform_5(%arg0: i32) -> (i32, i32) {
    %c0_i32 = arith.constant 0 : i32
    %c0_i32_0 = arith.constant 0 : i32
    %c0_i32_1 = arith.constant 0 : i32
    return %c0_i32, %c0_i32_0 : i32, i32
  }
  func.func @transform_6(%arg0: i32) -> (i32, i32) {
    %c0_i32 = arith.constant 0 : i32
    %c0_i32_0 = arith.constant 0 : i32
    %c0_i32_1 = arith.constant 0 : i32
    return %c0_i32, %c0_i32_0 : i32, i32
  }
  func.func @transform_7(%arg0: i32) -> (i32, i32) {
    %c0_i32 = arith.constant 0 : i32
    %c0_i32_0 = arith.constant 0 : i32
    %c0_i32_1 = arith.constant 0 : i32
    return %c0_i32, %c0_i32_0 : i32, i32
  }
  func.func @transform_8(%arg0: i32) -> (i32, i32) {
    %c0_i32 = arith.constant 0 : i32
    %c0_i32_0 = arith.constant 0 : i32
    %c0_i32_1 = arith.constant 0 : i32
    return %c0_i32, %c0_i32_0 : i32, i32
  }
  func.func @transform_9(%arg0: i32) -> (i32, i32) {
    %c0_i32 = arith.constant 0 : i32
    %c0_i32_0 = arith.constant 0 : i32
    %c0_i32_1 = arith.constant 0 : i32
    return %c0_i32, %c0_i32_0 : i32, i32
  }
  func.func @transform_10(%arg0: i32) -> (i32, i32) {
    %c0_i32 = arith.constant 0 : i32
    %c0_i32_0 = arith.constant 0 : i32
    %c0_i32_1 = arith.constant 0 : i32
    return %c0_i32, %c0_i32_0 : i32, i32
  }
}

</mosaic_0001>

<llo_original>
// kernel: c3_forward.1
$region0: #{c3_forward.1}
  #allocation0 [shape = 'u32[]', space=smem, size = 0x4, offset = 0x4, fixed_abs, tag = 'smem constant byte address 0x4 - core index']
  #allocation1 [shape = 'u32[144,128]{1,0:T(1,128)}', space=vmem, size = 0x12000, scoped, tag = 'internal scratch']
  #allocation2 [shape = 'f32[40,512]{1,0:T(8,128)}', space=vmem, size = 0x14000, scoped, tag = 'scratch operand']
  %s0 = inlined_call_operand.vmem [shape: f32[4,512], index: 0, kind: input, shape index: {}]
  %s1 = inlined_call_operand.vmem [shape: f32[9,1,512], index: 1, kind: input, shape index: {}]
  %s2 = inlined_call_operand.vmem [shape: bf16[8,4], index: 2, kind: input, shape index: {}]
  %s3 = inlined_call_operand.vmem [shape: f32[8,1], index: 3, kind: input, shape index: {}]
  %s4 = inlined_call_operand.vmem [shape: bf16[4,8], index: 4, kind: input, shape index: {}]
  %s5 = inlined_call_operand.vmem [shape: f32[4,1], index: 5, kind: input, shape index: {}]
  %s6 = inlined_call_operand.vmem [shape: bf16[4,40], index: 6, kind: input, shape index: {}]
  %s7 = inlined_call_operand.vmem [shape: f32[4,1], index: 7, kind: input, shape index: {}]
  %s8 = inlined_call_operand.vmem [shape: bf16[8,8], index: 8, kind: input, shape index: {}]
  %s9 = inlined_call_operand.vmem [shape: f32[8,1], index: 9, kind: input, shape index: {}]
  %s10 = inlined_call_operand.vmem [shape: f32[8,512], index: 10, kind: output, shape index: {}]
  %s11 = sld [smem:[#allocation0]]
  $region50: #{c3_forward.1} parent=0
    _
  %s13 = ssub.s32 1, %s11
  %s14 = scalar_select 0, %s13, %s11
  // Predicated region
  $region2: #{c3_forward.1} parent=0 // pred_check
    _
  $region3: #{c3_forward.1} parent=0 // pred_check_branch
    %16 = sbr.rel (0) target = $region5
  $region4: #{c3_forward.1} parent=0 // pred_region
    _
  $region5: #{c3_forward.1} parent=0 // pred_fallthru
    _
  // Predicated region
  $region6: #{c3_forward.1} parent=0 // pred_check
    _
  $region7: #{c3_forward.1} parent=0 // pred_check_branch
    %18 = sbr.rel (0) target = $region9
  $region8: #{c3_forward.1} parent=0 // pred_region
    _
  $region9: #{c3_forward.1} parent=0 // pred_fallthru
    _
  // Predicated region
  $region10: #{c3_forward.1} parent=0 // pred_check
    _
  $region11: #{c3_forward.1} parent=0 // pred_check_branch
    %20 = sbr.rel (0) target = $region13
  $region12: #{c3_forward.1} parent=0 // pred_region
    _
  $region13: #{c3_forward.1} parent=0 // pred_fallthru
    _
  // Predicated region
  $region14: #{c3_forward.1} parent=0 // pred_check
    _
  $region15: #{c3_forward.1} parent=0 // pred_check_branch
    %22 = sbr.rel (0) target = $region17
  $region16: #{c3_forward.1} parent=0 // pred_region
    _
  $region17: #{c3_forward.1} parent=0 // pred_fallthru
    _
  // Predicated region
  $region18: #{c3_forward.1} parent=0 // pred_check
    _
  $region19: #{c3_forward.1} parent=0 // pred_check_branch
    %24 = sbr.rel (0) target = $region21
  $region20: #{c3_forward.1} parent=0 // pred_region
    _
  $region21: #{c3_forward.1} parent=0 // pred_fallthru
    _
  // Predicated region
  $region22: #{c3_forward.1} parent=0 // pred_check
    _
  $region23: #{c3_forward.1} parent=0 // pred_check_branch
    %26 = sbr.rel (0) target = $region25
  $region24: #{c3_forward.1} parent=0 // pred_region
    _
  $region25: #{c3_forward.1} parent=0 // pred_fallthru
    _
  // Predicated region
  $region26: #{c3_forward.1} parent=0 // pred_check
    _
  $region27: #{c3_forward.1} parent=0 // pred_check_branch
    %28 = sbr.rel (0) target = $region29
  $region28: #{c3_forward.1} parent=0 // pred_region
    _
  $region29: #{c3_forward.1} parent=0 // pred_fallthru
    _
  // Predicated region
  $region30: #{c3_forward.1} parent=0 // pred_check
    _
  $region31: #{c3_forward.1} parent=0 // pred_check_branch
    %30 = sbr.rel (0) target = $region33
  $region32: #{c3_forward.1} parent=0 // pred_region
    _
  $region33: #{c3_forward.1} parent=0 // pred_fallthru
    _
  // Predicated region
  $region34: #{c3_forward.1} parent=0 // pred_check
    _
  $region35: #{c3_forward.1} parent=0 // pred_check_branch
    %32 = sbr.rel (0) target = $region37
  $region36: #{c3_forward.1} parent=0 // pred_region
    _
  $region37: #{c3_forward.1} parent=0 // pred_fallthru
    _
  // Predicated region
  $region38: #{c3_forward.1} parent=0 // pred_check
    _
  $region39: #{c3_forward.1} parent=0 // pred_check_branch
    %34 = sbr.rel (0) target = $region41
  $region40: #{c3_forward.1} parent=0 // pred_region
    _
  $region41: #{c3_forward.1} parent=0 // pred_fallthru
    _
  %v36 = vld [vmem:[%s0] sm:$0xff]
  %v37 = vld [vmem:[%s0 + $0x8] sm:$0xff]
  %v38 = vld [vmem:[%s2] sm:$0xf]
  %v41 = vcombine.high %v36, %v36
  %v42 = vcombine.high %v37, %v37
  %v45 = vpack.c.bf16 %v36, %v36
  %v46 = vpack.c.bf16 %v41, %v41
  %v47 = vpack.c.bf16 %v37, %v37
  %v48 = vpack.c.bf16 %v42, %v42
  %v49 = vld [vmem:[%s3] sm:$0xff]
  %51 = vset.pattern.permute.xlu0 0
  %52 = vperm.xlu0 %51, %v49
  %v53 = vpop.permute.xlu0 %52
  %vm55 = vcmask 31744
  %v57 = vsel %vm55, %v38, 0
  %vm59 = vcmask 1041408
  %v61 = vsel %vm59, %v45, 0
  %v64 = vsel %vm59, %v46, 0
  %v67 = vsel %vm59, %v47, 0
  %v70 = vsel %vm59, %v48, 0
  %72 = vmatprep.subr.bf16.mxu0 %v64
  %73 = vmatpush1.bf16.msra.mxu0 %v61
  %74 = vmatprep.subr.bf16.mxu0 0
  %75 = vmatpush1.bf16.msra.mxu0 0
  %76 = vmatprep.subr.bf16.mxu0 0
  %77 = vmatpush1.bf16.msra.mxu0 0
  %78 = vmatprep.subr.bf16.mxu0 0
  %79 = vmatpush1.bf16.msra.mxu0 0
  %80 = vmatprep.subr.bf16.mxu0 0
  %81 = vmatpush1.bf16.msra.mxu0 0
  %82 = vmatprep.subr.bf16.mxu0 0
  %83 = vmatpush1.bf16.msra.mxu0 0
  %84 = vmatprep.subr.bf16.mxu0 0
  %85 = vmatpush1.bf16.msra.mxu0 0
  %86 = vmatprep.subr.bf16.mxu0 0
  %87 = vmatpush1.bf16.msra.mxu0 0
  %88 = vmatprep.subr.bf16.mxu0 0
  %89 = vmatpush1.bf16.msra.mxu0 0
  %90 = vmatprep.subr.bf16.mxu0 0
  %91 = vmatpush1.bf16.msra.mxu0 0
  %92 = vmatprep.subr.bf16.mxu0 0
  %93 = vmatpush1.bf16.msra.mxu0 0
  %94 = vmatprep.subr.bf16.mxu0 0
  %95 = vmatpush1.bf16.msra.mxu0 0
  %96 = vmatprep.subr.bf16.mxu0 0
  %97 = vmatpush1.bf16.msra.mxu0 0
  %98 = vmatprep.subr.bf16.mxu0 0
  %99 = vmatpush1.bf16.msra.mxu0 0
  %100 = vmatprep.subr.bf16.mxu0 0
  %101 = vmatpush1.bf16.msra.mxu0 0
  %102 = vmatprep.subr.bf16.mxu0 0
  %103 = vmatpush1.bf16.msra.mxu0 0
  %104 = vmatprep.mubr.bf16.mxu0 0
  %105 = vmatmul.mubr.bf16.gmra.mrb[0].mxu0 %v57
  %v106 = vpop.f32.mrb[0].mxu0
  %v107 = vadd.f32 %v53, %v106
  %v108 = vpop.f32.mrb[0].mxu0
  %v109 = vadd.f32 %v53, %v108
  %v110 = vpop.f32.mrb[0].mxu0
  %v111 = vpop.f32.mrb[0].mxu0
  %112 = vdwg.mxu0
  %113 = vmatprep.subr.bf16.mxu0 %v70
  %114 = vmatpush1.bf16.msra.mxu0 %v67
  %115 = vmatprep.subr.bf16.mxu0 0
  %116 = vmatpush1.bf16.msra.mxu0 0
  %117 = vmatprep.subr.bf16.mxu0 0
  %118 = vmatpush1.bf16.msra.mxu0 0
  %119 = vmatprep.subr.bf16.mxu0 0
  %120 = vmatpush1.bf16.msra.mxu0 0
  %121 = vmatprep.subr.bf16.mxu0 0
  %122 = vmatpush1.bf16.msra.mxu0 0
  %123 = vmatprep.subr.bf16.mxu0 0
  %124 = vmatpush1.bf16.msra.mxu0 0
  %125 = vmatprep.subr.bf16.mxu0 0
  %126 = vmatpush1.bf16.msra.mxu0 0
  %127 = vmatprep.subr.bf16.mxu0 0
  %128 = vmatpush1.bf16.msra.mxu0 0
  %129 = vmatprep.subr.bf16.mxu0 0
  %130 = vmatpush1.bf16.msra.mxu0 0
  %131 = vmatprep.subr.bf16.mxu0 0
  %132 = vmatpush1.bf16.msra.mxu0 0
  %133 = vmatprep.subr.bf16.mxu0 0
  %134 = vmatpush1.bf16.msra.mxu0 0
  %135 = vmatprep.subr.bf16.mxu0 0
  %136 = vmatpush1.bf16.msra.mxu0 0
  %137 = vmatprep.subr.bf16.mxu0 0
  %138 = vmatpush1.bf16.msra.mxu0 0
  %139 = vmatprep.subr.bf16.mxu0 0
  %140 = vmatpush1.bf16.msra.mxu0 0
  %141 = vmatprep.subr.bf16.mxu0 0
  %142 = vmatpush1.bf16.msra.mxu0 0
  %143 = vmatprep.subr.bf16.mxu0 0
  %144 = vmatpush1.bf16.msra.mxu0 0
  %145 = vmatprep.mubr.bf16.mxu0 0
  %146 = vmatmul.mubr.bf16.gmra.mrb[0].mxu0 %v57
  %v147 = vpop.f32.mrb[0].mxu0
  %v148 = vadd.f32 %v53, %v147
  %v149 = vpop.f32.mrb[0].mxu0
  %v150 = vadd.f32 %v53, %v149
  %v151 = vpop.f32.mrb[0].mxu0
  %v152 = vpop.f32.mrb[0].mxu0
  %153 = vdwg.mxu0
  %v154 = vmul.f32 %v107, 0.5
  %v155 = vmul.f32 %v109, 0.5
  %v156 = vmul.f32 %v148, 0.5
  %v157 = vmul.f32 %v150, 0.5
  %v158 = vtanh.pop %v154
  %v159 = vtanh.pop %v155
  %v160 = vtanh.pop %v156
  %v161 = vtanh.pop %v157
  %v162 = vmul.f32 %v158, 0.5
  %v163 = vmul.f32 %v159, 0.5
  %v164 = vmul.f32 %v160, 0.5
  %v165 = vmul.f32 %v161, 0.5
  %v166 = vadd.f32 %v162, 0.5
  %v167 = vadd.f32 %v163, 0.5
  %v168 = vadd.f32 %v164, 0.5
  %v169 = vadd.f32 %v165, 0.5
  %v170 = vmul.f32 %v107, %v166
  %v171 = vmul.f32 %v109, %v167
  %v172 = vmul.f32 %v148, %v168
  %v173 = vmul.f32 %v150, %v169
  %v174 = vld [vmem:[%s4] sm:$0x3]
  %v175 = vpack.c.bf16 %v170, %v170
  %v176 = vpack.c.bf16 %v171, %v171
  %v177 = vpack.c.bf16 %v172, %v172
  %v178 = vpack.c.bf16 %v173, %v173
  %v179 = vld [vmem:[%s5] sm:$0xf]
  %181 = vset.pattern.permute.xlu0 0
  %182 = vperm.xlu0 %181, %v179
  %v183 = vpop.permute.xlu0 %182
  %vm185 = vcmask 64512
  %v187 = vsel %vm185, %v174, 0
  %vm189 = vcmask 1043456
  %v191 = vsel %vm189, %v175, 0
  %v194 = vsel %vm189, %v176, 0
  %v197 = vsel %vm189, %v177, 0
  %v200 = vsel %vm189, %v178, 0
  %202 = vmatprep.subr.bf16.mxu0 %v194
  %203 = vmatpush1.bf16.msra.mxu0 %v191
  %204 = vmatprep.subr.bf16.mxu0 0
  %205 = vmatpush1.bf16.msra.mxu0 0
  %206 = vmatprep.subr.bf16.mxu0 0
  %207 = vmatpush1.bf16.msra.mxu0 0
  %208 = vmatprep.subr.bf16.mxu0 0
  %209 = vmatpush1.bf16.msra.mxu0 0
  %210 = vmatprep.subr.bf16.mxu0 0
  %211 = vmatpush1.bf16.msra.mxu0 0
  %212 = vmatprep.subr.bf16.mxu0 0
  %213 = vmatpush1.bf16.msra.mxu0 0
  %214 = vmatprep.subr.bf16.mxu0 0
  %215 = vmatpush1.bf16.msra.mxu0 0
  %216 = vmatprep.subr.bf16.mxu0 0
  %217 = vmatpush1.bf16.msra.mxu0 0
  %218 = vmatprep.subr.bf16.mxu0 0
  %219 = vmatpush1.bf16.msra.mxu0 0
  %220 = vmatprep.subr.bf16.mxu0 0
  %221 = vmatpush1.bf16.msra.mxu0 0
  %222 = vmatprep.subr.bf16.mxu0 0
  %223 = vmatpush1.bf16.msra.mxu0 0
  %224 = vmatprep.subr.bf16.mxu0 0
  %225 = vmatpush1.bf16.msra.mxu0 0
  %226 = vmatprep.subr.bf16.mxu0 0
  %227 = vmatpush1.bf16.msra.mxu0 0
  %228 = vmatprep.subr.bf16.mxu0 0
  %229 = vmatpush1.bf16.msra.mxu0 0
  %230 = vmatprep.subr.bf16.mxu0 0
  %231 = vmatpush1.bf16.msra.mxu0 0
  %232 = vmatprep.subr.bf16.mxu0 0
  %233 = vmatpush1.bf16.msra.mxu0 0
  %234 = vmatprep.mubr.bf16.mxu0 0
  %235 = vmatmul.mubr.bf16.gmra.mrb[0].mxu0 %v187
  %v236 = vpop.f32.mrb[0].mxu0
  %v237 = vadd.f32 %v183, %v236
  %v238 = vpop.f32.mrb[0].mxu0
  %v239 = vadd.f32 %v183, %v238
  %v240 = vpop.f32.mrb[0].mxu0
  %v241 = vpop.f32.mrb[0].mxu0
  %242 = vdwg.mxu0
  %243 = vmatprep.subr.bf16.mxu0 %v200
  %244 = vmatpush1.bf16.msra.mxu0 %v197
  %245 = vmatprep.subr.bf16.mxu0 0
  %246 = vmatpush1.bf16.msra.mxu0 0
  %247 = vmatprep.subr.bf16.mxu0 0
  %248 = vmatpush1.bf16.msra.mxu0 0
  %249 = vmatprep.subr.bf16.mxu0 0
  %250 = vmatpush1.bf16.msra.mxu0 0
  %251 = vmatprep.subr.bf16.mxu0 0
  %252 = vmatpush1.bf16.msra.mxu0 0
  %253 = vmatprep.subr.bf16.mxu0 0
  %254 = vmatpush1.bf16.msra.mxu0 0
  %255 = vmatprep.subr.bf16.mxu0 0
  %256 = vmatpush1.bf16.msra.mxu0 0
  %257 = vmatprep.subr.bf16.mxu0 0
  %258 = vmatpush1.bf16.msra.mxu0 0
  %259 = vmatprep.subr.bf16.mxu0 0
  %260 = vmatpush1.bf16.msra.mxu0 0
  %261 = vmatprep.subr.bf16.mxu0 0
  %262 = vmatpush1.bf16.msra.mxu0 0
  %263 = vmatprep.subr.bf16.mxu0 0
  %264 = vmatpush1.bf16.msra.mxu0 0
  %265 = vmatprep.subr.bf16.mxu0 0
  %266 = vmatpush1.bf16.msra.mxu0 0
  %267 = vmatprep.subr.bf16.mxu0 0
  %268 = vmatpush1.bf16.msra.mxu0 0
  %269 = vmatprep.subr.bf16.mxu0 0
  %270 = vmatpush1.bf16.msra.mxu0 0
  %271 = vmatprep.subr.bf16.mxu0 0
  %272 = vmatpush1.bf16.msra.mxu0 0
  %273 = vmatprep.subr.bf16.mxu0 0
  %274 = vmatpush1.bf16.msra.mxu0 0
  %275 = vmatprep.mubr.bf16.mxu0 0
  %276 = vmatmul.mubr.bf16.gmra.mrb[0].mxu0 %v187
  %v277 = vpop.f32.mrb[0].mxu0
  %v278 = vadd.f32 %v183, %v277
  %v279 = vpop.f32.mrb[0].mxu0
  %v280 = vadd.f32 %v183, %v279
  %v281 = vpop.f32.mrb[0].mxu0
  %v282 = vpop.f32.mrb[0].mxu0
  %283 = vdwg.mxu0
  %v284 = vmul.f32 %v237, 0.5
  %v285 = vmul.f32 %v239, 0.5
  %v286 = vmul.f32 %v278, 0.5
  %v287 = vmul.f32 %v280, 0.5
  %v288 = vtanh.pop %v284
  %v289 = vtanh.pop %v285
  %v290 = vtanh.pop %v286
  %v291 = vtanh.pop %v287
  %v292 = vmul.f32 %v288, 0.5
  %v293 = vmul.f32 %v289, 0.5
  %v294 = vmul.f32 %v290, 0.5
  %v295 = vmul.f32 %v291, 0.5
  %v296 = vadd.f32 %v292, 0.5
  %v297 = vadd.f32 %v293, 0.5
  %v298 = vadd.f32 %v294, 0.5
  %v299 = vadd.f32 %v295, 0.5
  %v300 = vmul.f32 %v237, %v296
  %v301 = vmul.f32 %v239, %v297
  %v302 = vmul.f32 %v278, %v298
  %v303 = vmul.f32 %v280, %v299
  %304 = vrot.lane.b32.xlu0 %v300, 17
  %v305 = vpop.permute.xlu0 %304
  %306 = vrot.lane.b32.xlu0 %v301, 17
  %v307 = vpop.permute.xlu0 %306
  %308 = vrot.lane.b32.xlu0 %v302, 17
  %v309 = vpop.permute.xlu0 %308
  %310 = vrot.lane.b32.xlu0 %v303, 17
  %v311 = vpop.permute.xlu0 %310
  %v312 = vlaneseq
  %v313 = vand.u32 %v312, 127
  %vm314 = vcmp.lt.s32.totalorder %v313, 17
  %v315 = vsel %vm314, %v309, %v311
  %v316 = vsel %vm314, %v307, %v309
  %v317 = vsel %vm314, %v305, %v307
  %v318 = vsel %vm314, %v311, %v305
  %v319 = vld [vmem:[%s1] sm:$0xf]
  %v321 = vlaneseq
  %v322 = vshrl.u32 %v321, 7
  %v323 = vsub.s32 0, %v322
  %v324 = vrot.slane %v319, %v323
  %v325 = vlaneseq
  %v326 = vshrl.u32 %v325, 7
  %v327 = vsub.s32 1, %v326
  %v328 = vrot.slane %v319, %v327
  %v329 = vlaneseq
  %v330 = vshrl.u32 %v329, 7
  %v331 = vsub.s32 2, %v330
  %v332 = vrot.slane %v319, %v331
  %v333 = vlaneseq
  %v334 = vshrl.u32 %v333, 7
  %v335 = vsub.s32 3, %v334
  %v336 = vrot.slane %v319, %v335
  %v341 = vmul.f32 %v318, %v324
  %v342 = vmul.f32 %v317, %v328
  %v343 = vmul.f32 %v316, %v332
  %v344 = vmul.f32 %v315, %v336
  %345 = vst [vmem:[#allocation2] sm:$0xf] %v341
  %346 = vst [vmem:[#allocation2 + $0x8] sm:$0xf] %v342
  %347 = vst [vmem:[#allocation2 + $0x10] sm:$0xf] %v343
  %348 = vst [vmem:[#allocation2 + $0x18] sm:$0xf] %v344
  %349 = vrot.lane.b32.xlu0 %v300, 16
  %v350 = vpop.permute.xlu0 %349
  %351 = vrot.lane.b32.xlu0 %v301, 16
  %v352 = vpop.permute.xlu0 %351
  %353 = vrot.lane.b32.xlu0 %v302, 16
  %v354 = vpop.permute.xlu0 %353
  %355 = vrot.lane.b32.xlu0 %v303, 16
  %v356 = vpop.permute.xlu0 %355
  %vm357 = vcmp.lt.s32.totalorder %v313, 16
  %v358 = vsel %vm357, %v354, %v356
  %v359 = vsel %vm357, %v352, %v354
  %v360 = vsel %vm357, %v350, %v352
  %v361 = vsel %vm357, %v356, %v350
  %s362 = scalar_lea.vmem %s1, 4
  %v363 = vld [vmem:[%s362] sm:$0xf]
  %v365 = vlaneseq
  %v366 = vshrl.u32 %v365, 7
  %v367 = vsub.s32 0, %v366
  %v368 = vrot.slane %v363, %v367
  %v369 = vlaneseq
  %v370 = vshrl.u32 %v369, 7
  %v371 = vsub.s32 1, %v370
  %v372 = vrot.slane %v363, %v371
  %v373 = vlaneseq
  %v374 = vshrl.u32 %v373, 7
  %v375 = vsub.s32 2, %v374
  %v376 = vrot.slane %v363, %v375
  %v377 = vlaneseq
  %v378 = vshrl.u32 %v377, 7
  %v379 = vsub.s32 3, %v378
  %v380 = vrot.slane %v363, %v379
  %v385 = vmul.f32 %v361, %v368
  %v386 = vmul.f32 %v360, %v372
  %v387 = vmul.f32 %v359, %v376
  %v388 = vmul.f32 %v358, %v380
  %v393 = vrot.slane %v385, 4
  %v394 = vrot.slane %v386, 4
  %v395 = vrot.slane %v387, 4
  %v396 = vrot.slane %v388, 4
  %401 = vst [vmem:[#allocation2] sm:$0xf0] %v393
  %402 = vst [vmem:[#allocation2 + $0x8] sm:$0xf0] %v394
  %403 = vst [vmem:[#allocation2 + $0x10] sm:$0xf0] %v395
  %404 = vst [vmem:[#allocation2 + $0x18] sm:$0xf0] %v396
  %405 = vrot.lane.b32.xlu0 %v300, 15
  %v406 = vpop.permute.xlu0 %405
  %407 = vrot.lane.b32.xlu0 %v301, 15
  %v408 = vpop.permute.xlu0 %407
  %409 = vrot.lane.b32.xlu0 %v302, 15
  %v410 = vpop.permute.xlu0 %409
  %411 = vrot.lane.b32.xlu0 %v303, 15
  %v412 = vpop.permute.xlu0 %411
  %vm413 = vcmp.lt.s32.totalorder %v313, 15
  %v414 = vsel %vm413, %v410, %v412
  %v415 = vsel %vm413, %v408, %v410
  %v416 = vsel %vm413, %v406, %v408
  %v417 = vsel %vm413, %v412, %v406
  %s418 = scalar_lea.vmem %s1, 8
  %v419 = vld [vmem:[%s418] sm:$0xf]
  %v421 = vlaneseq
  %v422 = vshrl.u32 %v421, 7
  %v423 = vsub.s32 0, %v422
  %v424 = vrot.slane %v419, %v423
  %v425 = vlaneseq
  %v426 = vshrl.u32 %v425, 7
  %v427 = vsub.s32 1, %v426
  %v428 = vrot.slane %v419, %v427
  %v429 = vlaneseq
  %v430 = vshrl.u32 %v429, 7
  %v431 = vsub.s32 2, %v430
  %v432 = vrot.slane %v419, %v431
  %v433 = vlaneseq
  %v434 = vshrl.u32 %v433, 7
  %v435 = vsub.s32 3, %v434
  %v436 = vrot.slane %v419, %v435
  %v441 = vmul.f32 %v417, %v424
  %v442 = vmul.f32 %v416, %v428
  %v443 = vmul.f32 %v415, %v432
  %v444 = vmul.f32 %v414, %v436
  %445 = vst [vmem:[#allocation2 + $0x20] sm:$0xf] %v441
  %446 = vst [vmem:[#allocation2 + $0x28] sm:$0xf] %v442
  %447 = vst [vmem:[#allocation2 + $0x30] sm:$0xf] %v443
  %448 = vst [vmem:[#allocation2 + $0x38] sm:$0xf] %v444
  %449 = vrot.lane.b32.xlu0 %v300, 1
  %v450 = vpop.permute.xlu0 %449
  %451 = vrot.lane.b32.xlu0 %v301, 1
  %v452 = vpop.permute.xlu0 %451
  %453 = vrot.lane.b32.xlu0 %v302, 1
  %v454 = vpop.permute.xlu0 %453
  %455 = vrot.lane.b32.xlu0 %v303, 1
  %v456 = vpop.permute.xlu0 %455
  %vm457 = vcmp.lt.s32.totalorder %v313, 1
  %v458 = vsel %vm457, %v454, %v456
  %v459 = vsel %vm457, %v452, %v454
  %v460 = vsel %vm457, %v450, %v452
  %v461 = vsel %vm457, %v456, %v450
  %s462 = scalar_lea.vmem %s1, 12
  %v463 = vld [vmem:[%s462] sm:$0xf]
  %v465 = vlaneseq
  %v466 = vshrl.u32 %v465, 7
  %v467 = vsub.s32 0, %v466
  %v468 = vrot.slane %v463, %v467
  %v469 = vlaneseq
  %v470 = vshrl.u32 %v469, 7
  %v471 = vsub.s32 1, %v470
  %v472 = vrot.slane %v463, %v471
  %v473 = vlaneseq
  %v474 = vshrl.u32 %v473, 7
  %v475 = vsub.s32 2, %v474
  %v476 = vrot.slane %v463, %v475
  %v477 = vlaneseq
  %v478 = vshrl.u32 %v477, 7
  %v479 = vsub.s32 3, %v478
  %v480 = vrot.slane %v463, %v479
  %v485 = vmul.f32 %v461, %v468
  %v486 = vmul.f32 %v460, %v472
  %v487 = vmul.f32 %v459, %v476
  %v488 = vmul.f32 %v458, %v480
  %v493 = vrot.slane %v485, 4
  %v494 = vrot.slane %v486, 4
  %v495 = vrot.slane %v487, 4
  %v496 = vrot.slane %v488, 4
  %501 = vst [vmem:[#allocation2 + $0x20] sm:$0xf0] %v493
  %502 = vst [vmem:[#allocation2 + $0x28] sm:$0xf0] %v494
  %503 = vst [vmem:[#allocation2 + $0x30] sm:$0xf0] %v495
  %504 = vst [vmem:[#allocation2 + $0x38] sm:$0xf0] %v496
  %s505 = scalar_lea.vmem %s1, 16
  %v506 = vld [vmem:[%s505] sm:$0xf]
  %v508 = vlaneseq
  %v509 = vshrl.u32 %v508, 7
  %v510 = vsub.s32 0, %v509
  %v511 = vrot.slane %v506, %v510
  %v512 = vlaneseq
  %v513 = vshrl.u32 %v512, 7
  %v514 = vsub.s32 1, %v513
  %v515 = vrot.slane %v506, %v514
  %v516 = vlaneseq
  %v517 = vshrl.u32 %v516, 7
  %v518 = vsub.s32 2, %v517
  %v519 = vrot.slane %v506, %v518
  %v520 = vlaneseq
  %v521 = vshrl.u32 %v520, 7
  %v522 = vsub.s32 3, %v521
  %v523 = vrot.slane %v506, %v522
  %v528 = vmul.f32 %v300, %v511
  %v529 = vmul.f32 %v301, %v515
  %v530 = vmul.f32 %v302, %v519
  %v531 = vmul.f32 %v303, %v523
  %532 = vst [vmem:[#allocation2 + $0x40] sm:$0xf] %v528
  %533 = vst [vmem:[#allocation2 + $0x48] sm:$0xf] %v529
  %534 = vst [vmem:[#allocation2 + $0x50] sm:$0xf] %v530
  %535 = vst [vmem:[#allocation2 + $0x58] sm:$0xf] %v531
  %536 = vrot.lane.b32.xlu0 %v300, 127
  %v537 = vpop.permute.xlu0 %536
  %538 = vrot.lane.b32.xlu0 %v301, 127
  %v539 = vpop.permute.xlu0 %538
  %540 = vrot.lane.b32.xlu0 %v302, 127
  %v541 = vpop.permute.xlu0 %540
  %542 = vrot.lane.b32.xlu0 %v303, 127
  %v543 = vpop.permute.xlu0 %542
  %vm544 = vcmp.lt.s32.totalorder %v313, 127
  %v545 = vsel %vm544, %v541, %v543
  %v546 = vsel %vm544, %v539, %v541
  %v547 = vsel %vm544, %v537, %v539
  %v548 = vsel %vm544, %v543, %v537
  %s549 = scalar_lea.vmem %s1, 20
  %v550 = vld [vmem:[%s549] sm:$0xf]
  %v552 = vlaneseq
  %v553 = vshrl.u32 %v552, 7
  %v554 = vsub.s32 0, %v553
  %v555 = vrot.slane %v550, %v554
  %v556 = vlaneseq
  %v557 = vshrl.u32 %v556, 7
  %v558 = vsub.s32 1, %v557
  %v559 = vrot.slane %v550, %v558
  %v560 = vlaneseq
  %v561 = vshrl.u32 %v560, 7
  %v562 = vsub.s32 2, %v561
  %v563 = vrot.slane %v550, %v562
  %v564 = vlaneseq
  %v565 = vshrl.u32 %v564, 7
  %v566 = vsub.s32 3, %v565
  %v567 = vrot.slane %v550, %v566
  %v572 = vmul.f32 %v547, %v555
  %v573 = vmul.f32 %v546, %v559
  %v574 = vmul.f32 %v545, %v563
  %v575 = vmul.f32 %v548, %v567
  %v580 = vrot.slane %v572, 4
  %v581 = vrot.slane %v573, 4
  %v582 = vrot.slane %v574, 4
  %v583 = vrot.slane %v575, 4
  %588 = vst [vmem:[#allocation2 + $0x40] sm:$0xf0] %v580
  %589 = vst [vmem:[#allocation2 + $0x48] sm:$0xf0] %v581
  %590 = vst [vmem:[#allocation2 + $0x50] sm:$0xf0] %v582
  %591 = vst [vmem:[#allocation2 + $0x58] sm:$0xf0] %v583
  %592 = vrot.lane.b32.xlu0 %v300, 113
  %v593 = vpop.permute.xlu0 %592
  %594 = vrot.lane.b32.xlu0 %v301, 113
  %v595 = vpop.permute.xlu0 %594
  %596 = vrot.lane.b32.xlu0 %v302, 113
  %v597 = vpop.permute.xlu0 %596
  %598 = vrot.lane.b32.xlu0 %v303, 113
  %v599 = vpop.permute.xlu0 %598
  %vm600 = vcmp.lt.s32.totalorder %v313, 113
  %v601 = vsel %vm600, %v597, %v599
  %v602 = vsel %vm600, %v595, %v597
  %v603 = vsel %vm600, %v593, %v595
  %v604 = vsel %vm600, %v599, %v593
  %s605 = scalar_lea.vmem %s1, 24
  %v606 = vld [vmem:[%s605] sm:$0xf]
  %v608 = vlaneseq
  %v609 = vshrl.u32 %v608, 7
  %v610 = vsub.s32 0, %v609
  %v611 = vrot.slane %v606, %v610
  %v612 = vlaneseq
  %v613 = vshrl.u32 %v612, 7
  %v614 = vsub.s32 1, %v613
  %v615 = vrot.slane %v606, %v614
  %v616 = vlaneseq
  %v617 = vshrl.u32 %v616, 7
  %v618 = vsub.s32 2, %v617
  %v619 = vrot.slane %v606, %v618
  %v620 = vlaneseq
  %v621 = vshrl.u32 %v620, 7
  %v622 = vsub.s32 3, %v621
  %v623 = vrot.slane %v606, %v622
  %v628 = vmul.f32 %v603, %v611
  %v629 = vmul.f32 %v602, %v615
  %v630 = vmul.f32 %v601, %v619
  %v631 = vmul.f32 %v604, %v623
  %632 = vst [vmem:[#allocation2 + $0x60] sm:$0xf] %v628
  %633 = vst [vmem:[#allocation2 + $0x68] sm:$0xf] %v629
  %634 = vst [vmem:[#allocation2 + $0x70] sm:$0xf] %v630
  %635 = vst [vmem:[#allocation2 + $0x78] sm:$0xf] %v631
  %636 = vrot.lane.b32.xlu0 %v300, 112
  %v637 = vpop.permute.xlu0 %636
  %638 = vrot.lane.b32.xlu0 %v301, 112
  %v639 = vpop.permute.xlu0 %638
  %640 = vrot.lane.b32.xlu0 %v302, 112
  %v641 = vpop.permute.xlu0 %640
  %642 = vrot.lane.b32.xlu0 %v303, 112
  %v643 = vpop.permute.xlu0 %642
  %vm644 = vcmp.lt.s32.totalorder %v313, 112
  %v645 = vsel %vm644, %v641, %v643
  %v646 = vsel %vm644, %v639, %v641
  %v647 = vsel %vm644, %v637, %v639
  %v648 = vsel %vm644, %v643, %v637
  %s649 = scalar_lea.vmem %s1, 28
  %v650 = vld [vmem:[%s649] sm:$0xf]
  %v652 = vlaneseq
  %v653 = vshrl.u32 %v652, 7
  %v654 = vsub.s32 0, %v653
  %v655 = vrot.slane %v650, %v654
  %v656 = vlaneseq
  %v657 = vshrl.u32 %v656, 7
  %v658 = vsub.s32 1, %v657
  %v659 = vrot.slane %v650, %v658
  %v660 = vlaneseq
  %v661 = vshrl.u32 %v660, 7
  %v662 = vsub.s32 2, %v661
  %v663 = vrot.slane %v650, %v662
  %v664 = vlaneseq
  %v665 = vshrl.u32 %v664, 7
  %v666 = vsub.s32 3, %v665
  %v667 = vrot.slane %v650, %v666
  %v672 = vmul.f32 %v647, %v655
  %v673 = vmul.f32 %v646, %v659
  %v674 = vmul.f32 %v645, %v663
  %v675 = vmul.f32 %v648, %v667
  %v680 = vrot.slane %v672, 4
  %v681 = vrot.slane %v673, 4
  %v682 = vrot.slane %v674, 4
  %v683 = vrot.slane %v675, 4
  %688 = vst [vmem:[#allocation2 + $0x60] sm:$0xf0] %v680
  %689 = vst [vmem:[#allocation2 + $0x68] sm:$0xf0] %v681
  %690 = vst [vmem:[#allocation2 + $0x70] sm:$0xf0] %v682
  %691 = vst [vmem:[#allocation2 + $0x78] sm:$0xf0] %v683
  %692 = vrot.lane.b32.xlu0 %v300, 111
  %v693 = vpop.permute.xlu0 %692
  %694 = vrot.lane.b32.xlu0 %v301, 111
  %v695 = vpop.permute.xlu0 %694
  %696 = vrot.lane.b32.xlu0 %v302, 111
  %v697 = vpop.permute.xlu0 %696
  %698 = vrot.lane.b32.xlu0 %v303, 111
  %v699 = vpop.permute.xlu0 %698
  %vm700 = vcmp.lt.s32.totalorder %v313, 111
  %v701 = vsel %vm700, %v697, %v699
  %v702 = vsel %vm700, %v695, %v697
  %v703 = vsel %vm700, %v693, %v695
  %v704 = vsel %vm700, %v699, %v693
  %s705 = scalar_lea.vmem %s1, 32
  %v706 = vld [vmem:[%s705] sm:$0xf]
  %v708 = vlaneseq
  %v709 = vshrl.u32 %v708, 7
  %v710 = vsub.s32 0, %v709
  %v711 = vrot.slane %v706, %v710
  %v712 = vlaneseq
  %v713 = vshrl.u32 %v712, 7
  %v714 = vsub.s32 1, %v713
  %v715 = vrot.slane %v706, %v714
  %v716 = vlaneseq
  %v717 = vshrl.u32 %v716, 7
  %v718 = vsub.s32 2, %v717
  %v719 = vrot.slane %v706, %v718
  %v720 = vlaneseq
  %v721 = vshrl.u32 %v720, 7
  %v722 = vsub.s32 3, %v721
  %v723 = vrot.slane %v706, %v722
  %v728 = vmul.f32 %v703, %v711
  %v729 = vmul.f32 %v702, %v715
  %v730 = vmul.f32 %v701, %v719
  %v731 = vmul.f32 %v704, %v723
  %732 = vst [vmem:[#allocation2 + $0x80] sm:$0xf] %v728
  %733 = vst [vmem:[#allocation2 + $0x88] sm:$0xf] %v729
  %734 = vst [vmem:[#allocation2 + $0x90] sm:$0xf] %v730
  %735 = vst [vmem:[#allocation2 + $0x98] sm:$0xf] %v731
  %736 = vst [vmem:[#allocation2 + $0x80] sm:$0xf0] 0.0
  %737 = vst [vmem:[#allocation2 + $0x88] sm:$0xf0] 0.0
  %738 = vst [vmem:[#allocation2 + $0x90] sm:$0xf0] 0.0
  %739 = vst [vmem:[#allocation2 + $0x98] sm:$0xf0] 0.0
  %v740 = vld [vmem:[#allocation2] sm:$0xff]
  %v741 = vld [vmem:[#allocation2 + $0x8] sm:$0xff]
  %v742 = vld [vmem:[#allocation2 + $0x10] sm:$0xff]
  %v743 = vld [vmem:[#allocation2 + $0x18] sm:$0xff]
  %v744 = vld [vmem:[#allocation2 + $0x20] sm:$0xff]
  %v745 = vld [vmem:[#allocation2 + $0x28] sm:$0xff]
  %v746 = vld [vmem:[#allocation2 + $0x30] sm:$0xff]
  %v747 = vld [vmem:[#allocation2 + $0x38] sm:$0xff]
  %v748 = vld [vmem:[#allocation2 + $0x40] sm:$0xff]
  %v749 = vld [vmem:[#allocation2 + $0x48] sm:$0xff]
  %v750 = vld [vmem:[#allocation2 + $0x50] sm:$0xff]
  %v751 = vld [vmem:[#allocation2 + $0x58] sm:$0xff]
  %v752 = vld [vmem:[#allocation2 + $0x60] sm:$0xff]
  %v753 = vld [vmem:[#allocation2 + $0x68] sm:$0xff]
  %v754 = vld [vmem:[#allocation2 + $0x70] sm:$0xff]
  %v755 = vld [vmem:[#allocation2 + $0x78] sm:$0xff]
  %v756 = vld [vmem:[#allocation2 + $0x80] sm:$0xff]
  %v757 = vld [vmem:[#allocation2 + $0x88] sm:$0xff]
  %v758 = vld [vmem:[#allocation2 + $0x90] sm:$0xff]
  %v759 = vld [vmem:[#allocation2 + $0x98] sm:$0xff]
  %v760 = vld [vmem:[%s6] sm:$0x3]
  %v761 = vpack.c.bf16 %v744, %v740
  %v762 = vpack.c.bf16 %v745, %v741
  %v763 = vpack.c.bf16 %v746, %v742
  %v764 = vpack.c.bf16 %v747, %v743
  %v765 = vpack.c.bf16 %v752, %v748
  %v766 = vpack.c.bf16 %v753, %v749
  %v767 = vpack.c.bf16 %v754, %v750
  %v768 = vpack.c.bf16 %v755, %v751
  %v769 = vpack.c.bf16 %v756, %v756
  %v770 = vpack.c.bf16 %v757, %v757
  %v771 = vpack.c.bf16 %v758, %v758
  %v772 = vpack.c.bf16 %v759, %v759
  %v773 = vld [vmem:[%s7] sm:$0xf]
  %775 = vset.pattern.permute.xlu0 0
  %776 = vperm.xlu0 %775, %v773
  %v777 = vpop.permute.xlu0 %776
  %vm779 = vcmask 326656
  %v781 = vsel %vm779, %v760, 0
  %v784 = vsel %vm189, %v769, 0
  %v787 = vsel %vm189, %v770, 0
  %v790 = vsel %vm189, %v771, 0
  %v793 = vsel %vm189, %v772, 0
  %795 = vmatprep.subr.bf16.mxu0 %v762
  %796 = vmatpush1.bf16.msra.mxu0 %v761
  %797 = vmatprep.subr.bf16.mxu0 %v766
  %798 = vmatpush1.bf16.msra.mxu0 %v765
  %799 = vmatprep.subr.bf16.mxu0 %v787
  %800 = vmatpush1.bf16.msra.mxu0 %v784
  %801 = vmatprep.subr.bf16.mxu0 0
  %802 = vmatpush1.bf16.msra.mxu0 0
  %803 = vmatprep.subr.bf16.mxu0 0
  %804 = vmatpush1.bf16.msra.mxu0 0
  %805 = vmatprep.subr.bf16.mxu0 0
  %806 = vmatpush1.bf16.msra.mxu0 0
  %807 = vmatprep.subr.bf16.mxu0 0
  %808 = vmatpush1.bf16.msra.mxu0 0
  %809 = vmatprep.subr.bf16.mxu0 0
  %810 = vmatpush1.bf16.msra.mxu0 0
  %811 = vmatprep.subr.bf16.mxu0 0
  %812 = vmatpush1.bf16.msra.mxu0 0
  %813 = vmatprep.subr.bf16.mxu0 0
  %814 = vmatpush1.bf16.msra.mxu0 0
  %815 = vmatprep.subr.bf16.mxu0 0
  %816 = vmatpush1.bf16.msra.mxu0 0
  %817 = vmatprep.subr.bf16.mxu0 0
  %818 = vmatpush1.bf16.msra.mxu0 0
  %819 = vmatprep.subr.bf16.mxu0 0
  %820 = vmatpush1.bf16.msra.mxu0 0
  %821 = vmatprep.subr.bf16.mxu0 0
  %822 = vmatpush1.bf16.msra.mxu0 0
  %823 = vmatprep.subr.bf16.mxu0 0
  %824 = vmatpush1.bf16.msra.mxu0 0
  %825 = vmatprep.subr.bf16.mxu0 0
  %826 = vmatpush1.bf16.msra.mxu0 0
  %827 = vmatprep.mubr.bf16.mxu0 0
  %828 = vmatmul.mubr.bf16.gmra.mrb[0].mxu0 %v781
  %v829 = vpop.f32.mrb[0].mxu0
  %v830 = vadd.f32 %v777, %v829
  %v831 = vpop.f32.mrb[0].mxu0
  %v832 = vadd.f32 %v777, %v831
  %v833 = vpop.f32.mrb[0].mxu0
  %v834 = vpop.f32.mrb[0].mxu0
  %835 = vdwg.mxu0
  %836 = vmatprep.subr.bf16.mxu0 %v764
  %837 = vmatpush1.bf16.msra.mxu0 %v763
  %838 = vmatprep.subr.bf16.mxu0 %v768
  %839 = vmatpush1.bf16.msra.mxu0 %v767
  %840 = vmatprep.subr.bf16.mxu0 %v793
  %841 = vmatpush1.bf16.msra.mxu0 %v790
  %842 = vmatprep.subr.bf16.mxu0 0
  %843 = vmatpush1.bf16.msra.mxu0 0
  %844 = vmatprep.subr.bf16.mxu0 0
  %845 = vmatpush1.bf16.msra.mxu0 0
  %846 = vmatprep.subr.bf16.mxu0 0
  %847 = vmatpush1.bf16.msra.mxu0 0
  %848 = vmatprep.subr.bf16.mxu0 0
  %849 = vmatpush1.bf16.msra.mxu0 0
  %850 = vmatprep.subr.bf16.mxu0 0
  %851 = vmatpush1.bf16.msra.mxu0 0
  %852 = vmatprep.subr.bf16.mxu0 0
  %853 = vmatpush1.bf16.msra.mxu0 0
  %854 = vmatprep.subr.bf16.mxu0 0
  %855 = vmatpush1.bf16.msra.mxu0 0
  %856 = vmatprep.subr.bf16.mxu0 0
  %857 = vmatpush1.bf16.msra.mxu0 0
  %858 = vmatprep.subr.bf16.mxu0 0
  %859 = vmatpush1.bf16.msra.mxu0 0
  %860 = vmatprep.subr.bf16.mxu0 0
  %861 = vmatpush1.bf16.msra.mxu0 0
  %862 = vmatprep.subr.bf16.mxu0 0
  %863 = vmatpush1.bf16.msra.mxu0 0
  %864 = vmatprep.subr.bf16.mxu0 0
  %865 = vmatpush1.bf16.msra.mxu0 0
  %866 = vmatprep.subr.bf16.mxu0 0
  %867 = vmatpush1.bf16.msra.mxu0 0
  %868 = vmatprep.mubr.bf16.mxu0 0
  %869 = vmatmul.mubr.bf16.gmra.mrb[0].mxu0 %v781
  %v870 = vpop.f32.mrb[0].mxu0
  %v871 = vadd.f32 %v777, %v870
  %v872 = vpop.f32.mrb[0].mxu0
  %v873 = vadd.f32 %v777, %v872
  %v874 = vpop.f32.mrb[0].mxu0
  %v875 = vpop.f32.mrb[0].mxu0
  %876 = vdwg.mxu0
  %v877 = vmul.f32 %v830, 0.5
  %v878 = vmul.f32 %v832, 0.5
  %v879 = vmul.f32 %v871, 0.5
  %v880 = vmul.f32 %v873, 0.5
  %v881 = vtanh.pop %v877
  %v882 = vtanh.pop %v878
  %v883 = vtanh.pop %v879
  %v884 = vtanh.pop %v880
  %v885 = vmul.f32 %v881, 0.5
  %v886 = vmul.f32 %v882, 0.5
  %v887 = vmul.f32 %v883, 0.5
  %v888 = vmul.f32 %v884, 0.5
  %v889 = vadd.f32 %v885, 0.5
  %v890 = vadd.f32 %v886, 0.5
  %v891 = vadd.f32 %v887, 0.5
  %v892 = vadd.f32 %v888, 0.5
  %v893 = vmul.f32 %v830, %v889
  %v894 = vmul.f32 %v832, %v890
  %v895 = vmul.f32 %v871, %v891
  %v896 = vmul.f32 %v873, %v892
  %v897 = vsel %vm189, %v893, 0.0
  %v898 = vsel %vm189, %v894, 0.0
  %v899 = vsel %vm189, %v895, 0.0
  %v900 = vsel %vm189, %v896, 0.0
  %v901 = vadd.f32 %v170, %v897
  %v902 = vadd.f32 %v171, %v898
  %v903 = vadd.f32 %v172, %v899
  %v904 = vadd.f32 %v173, %v900
  %v905 = vld [vmem:[%s8] sm:$0xf]
  %v906 = vpack.c.bf16 %v901, %v901
  %v907 = vpack.c.bf16 %v902, %v902
  %v908 = vpack.c.bf16 %v903, %v903
  %v909 = vpack.c.bf16 %v904, %v904
  %v910 = vld [vmem:[%s9] sm:$0xff]
  %912 = vset.pattern.permute.xlu0 0
  %913 = vperm.xlu0 %912, %v910
  %v914 = vpop.permute.xlu0 %913
  %v917 = vsel %vm185, %v905, 0
  %v920 = vsel %vm189, %v906, 0
  %v923 = vsel %vm189, %v907, 0
  %v926 = vsel %vm189, %v908, 0
  %v929 = vsel %vm189, %v909, 0
  %931 = vmatprep.subr.bf16.mxu0 %v923
  %932 = vmatpush1.bf16.msra.mxu0 %v920
  %933 = vmatprep.subr.bf16.mxu0 0
  %934 = vmatpush1.bf16.msra.mxu0 0
  %935 = vmatprep.subr.bf16.mxu0 0
  %936 = vmatpush1.bf16.msra.mxu0 0
  %937 = vmatprep.subr.bf16.mxu0 0
  %938 = vmatpush1.bf16.msra.mxu0 0
  %939 = vmatprep.subr.bf16.mxu0 0
  %940 = vmatpush1.bf16.msra.mxu0 0
  %941 = vmatprep.subr.bf16.mxu0 0
  %942 = vmatpush1.bf16.msra.mxu0 0
  %943 = vmatprep.subr.bf16.mxu0 0
  %944 = vmatpush1.bf16.msra.mxu0 0
  %945 = vmatprep.subr.bf16.mxu0 0
  %946 = vmatpush1.bf16.msra.mxu0 0
  %947 = vmatprep.subr.bf16.mxu0 0
  %948 = vmatpush1.bf16.msra.mxu0 0
  %949 = vmatprep.subr.bf16.mxu0 0
  %950 = vmatpush1.bf16.msra.mxu0 0
  %951 = vmatprep.subr.bf16.mxu0 0
  %952 = vmatpush1.bf16.msra.mxu0 0
  %953 = vmatprep.subr.bf16.mxu0 0
  %954 = vmatpush1.bf16.msra.mxu0 0
  %955 = vmatprep.subr.bf16.mxu0 0
  %956 = vmatpush1.bf16.msra.mxu0 0
  %957 = vmatprep.subr.bf16.mxu0 0
  %958 = vmatpush1.bf16.msra.mxu0 0
  %959 = vmatprep.subr.bf16.mxu0 0
  %960 = vmatpush1.bf16.msra.mxu0 0
  %961 = vmatprep.subr.bf16.mxu0 0
  %962 = vmatpush1.bf16.msra.mxu0 0
  %963 = vmatprep.mubr.bf16.mxu0 0
  %964 = vmatmul.mubr.bf16.gmra.mrb[0].mxu0 %v917
  %v965 = vpop.f32.mrb[0].mxu0
  %v966 = vadd.f32 %v914, %v965
  %v967 = vpop.f32.mrb[0].mxu0
  %v968 = vadd.f32 %v914, %v967
  %v969 = vpop.f32.mrb[0].mxu0
  %v970 = vpop.f32.mrb[0].mxu0
  %971 = vdwg.mxu0
  %972 = vmatprep.subr.bf16.mxu0 %v929
  %973 = vmatpush1.bf16.msra.mxu0 %v926
  %974 = vmatprep.subr.bf16.mxu0 0
  %975 = vmatpush1.bf16.msra.mxu0 0
  %976 = vmatprep.subr.bf16.mxu0 0
  %977 = vmatpush1.bf16.msra.mxu0 0
  %978 = vmatprep.subr.bf16.mxu0 0
  %979 = vmatpush1.bf16.msra.mxu0 0
  %980 = vmatprep.subr.bf16.mxu0 0
  %981 = vmatpush1.bf16.msra.mxu0 0
  %982 = vmatprep.subr.bf16.mxu0 0
  %983 = vmatpush1.bf16.msra.mxu0 0
  %984 = vmatprep.subr.bf16.mxu0 0
  %985 = vmatpush1.bf16.msra.mxu0 0
  %986 = vmatprep.subr.bf16.mxu0 0
  %987 = vmatpush1.bf16.msra.mxu0 0
  %988 = vmatprep.subr.bf16.mxu0 0
  %989 = vmatpush1.bf16.msra.mxu0 0
  %990 = vmatprep.subr.bf16.mxu0 0
  %991 = vmatpush1.bf16.msra.mxu0 0
  %992 = vmatprep.subr.bf16.mxu0 0
  %993 = vmatpush1.bf16.msra.mxu0 0
  %994 = vmatprep.subr.bf16.mxu0 0
  %995 = vmatpush1.bf16.msra.mxu0 0
  %996 = vmatprep.subr.bf16.mxu0 0
  %997 = vmatpush1.bf16.msra.mxu0 0
  %998 = vmatprep.subr.bf16.mxu0 0
  %999 = vmatpush1.bf16.msra.mxu0 0
  %1000 = vmatprep.subr.bf16.mxu0 0
  %1001 = vmatpush1.bf16.msra.mxu0 0
  %1002 = vmatprep.subr.bf16.mxu0 0
  %1003 = vmatpush1.bf16.msra.mxu0 0
  %1004 = vmatprep.mubr.bf16.mxu0 0
  %1005 = vmatmul.mubr.bf16.gmra.mrb[0].mxu0 %v917
  %v1006 = vpop.f32.mrb[0].mxu0
  %v1007 = vadd.f32 %v914, %v1006
  %v1008 = vpop.f32.mrb[0].mxu0
  %v1009 = vadd.f32 %v914, %v1008
  %v1010 = vpop.f32.mrb[0].mxu0
  %v1011 = vpop.f32.mrb[0].mxu0
  %1012 = vdwg.mxu0
  %v1013 = vmul.f32 %v966, 0.5
  %v1014 = vmul.f32 %v968, 0.5
  %v1015 = vmul.f32 %v1007, 0.5
  %v1016 = vmul.f32 %v1009, 0.5
  %v1017 = vtanh.pop %v1013
  %v1018 = vtanh.pop %v1014
  %v1019 = vtanh.pop %v1015
  %v1020 = vtanh.pop %v1016
  %v1021 = vmul.f32 %v1017, 0.5
  %v1022 = vmul.f32 %v1018, 0.5
  %v1023 = vmul.f32 %v1019, 0.5
  %v1024 = vmul.f32 %v1020, 0.5
  %v1025 = vadd.f32 %v1021, 0.5
  %v1026 = vadd.f32 %v1022, 0.5
  %v1027 = vadd.f32 %v1023, 0.5
  %v1028 = vadd.f32 %v1024, 0.5
  %v1029 = vmul.f32 %v966, %v1025
  %v1030 = vmul.f32 %v968, %v1026
  %v1031 = vmul.f32 %v1007, %v1027
  %v1032 = vmul.f32 %v1009, %v1028
  %1033 = vst [vmem:[%s10] sm:$0xff] %v1029
  %1034 = vst [vmem:[%s10 + $0x8] sm:$0xff] %v1030
  %1035 = vst [vmem:[%s10 + $0x10] sm:$0xff] %v1031
  %1036 = vst [vmem:[%s10 + $0x18] sm:$0xff] %v1032
  // Predicated region
  $region42: #{c3_forward.1} parent=0 // pred_check
    _
  $region43: #{c3_forward.1} parent=0 // pred_check_branch
    %1038 = sbr.rel (0) target = $region45
  $region44: #{c3_forward.1} parent=0 // pred_region
    _
  $region45: #{c3_forward.1} parent=0 // pred_fallthru
    _
  // Predicated region
  $region46: #{c3_forward.1} parent=0 // pred_check
    _
  $region47: #{c3_forward.1} parent=0 // pred_check_branch
    %1040 = sbr.rel (0) target = $region49
  $region48: #{c3_forward.1} parent=0 // pred_region
    _
  $region49: #{c3_forward.1} parent=0 // pred_fallthru
    _

</llo_original>
